<compile_context>
chip_gen: v7x
topology: tpu7x:2x2x1
jax: 0.10.0
libtpu: 0.0.40
codegen_flags: <defaults>
</compile_context>

<pallas_src>
import jax
import jax.numpy as jnp
import numpy as np
from jax.experimental import pallas as pl
from jax.experimental.pallas import tpu as pltpu


# ----------------------------------------------------------------------------
# Small helpers
# ----------------------------------------------------------------------------
def _round_up(n, m):
    return ((n + m - 1) // m) * m


def _cdiv(a, b):
    return -(-a // b)


def _pack_factor(d):
    # Pack P logical rows per 128-lane output row (lane-dense stores); fall
    # back to P=1 when D does not tile the 128-lane vreg width.
    return 128 // d if (0 < d < 128 and 128 % d == 0) else 1


def _pick_tile(n_rows, row_bytes, *, target_bytes=1 << 20, max_rows=8192):
    """Packed rows per grid step.

    Large tiles (~1 MiB of output per step) amortize the ~0.35 us grid-step
    overhead; when there is less than two full tiles of work we split roughly
    in half so both v7x TensorCores get a block.  Always a multiple of 8.
    """
    cap = max(8, min(max_rows, (target_bytes // max(row_bytes, 1)) // 8 * 8))
    if n_rows >= 2 * cap:
        return cap
    half = (n_rows + 1) // 2
    return max(8, min(cap, _round_up(half, 8)))


def _pack_rows(x, p):
    """Flatten [B, T] -> [N] and view as (N/P, P); pads x only if N % P != 0."""
    n = int(x.size)
    x_flat = x.reshape(-1).astype(jnp.float32)
    n_pad = _round_up(n, p)
    if n_pad != n:                       # rare: at most P-1 extra scalars
        x_flat = jnp.pad(x_flat, (0, n_pad - n))
    return x_flat.reshape(n_pad // p, p), n, n_pad


def _unpack_rows(out_packed, n, n_pad, d, batch_shape):
    out = out_packed.reshape(n_pad, d)   # bitwise-free for row-major layout
    if n_pad != n:                       # rare: only when B*T % P != 0
        out = out[:n]
    return out.reshape(*batch_shape, d)


# ----------------------------------------------------------------------------
# Kernel 1: bucketize + embedding lookup (n_bins > 0 path), lane-dense packed
# ----------------------------------------------------------------------------
def _bucketize_embed_kernel(x_ref, rep_ref, lo_ref, hi_ref, tab_ref, o_ref):
    # x_ref  : (TMP, P)       f32  P loudness values packed per row
    # rep_ref: (P, P*NB)      f32  replication matrix (row k is 1 on slot-k cols)
    # lo_ref : (1, P*NB)      f32  lower bin edge per packed column (-inf for bin 0)
    # hi_ref : (1, P*NB)      f32  upper bin edge per packed column (+inf for last bin)
    # tab_ref: (P*NB, P*D)    f32  block-diagonal embedding table
    # o_ref  : (TMP, P*D)     f32  P embeddings packed per (lane-dense) row
    #
    # x_rep[r, k*NB + b] == x[P*r + k]; multiplying by exact 0/1 weights on the
    # f32 MXU path reproduces x, so the bucket test below matches
    # torch.bucketize(x, bins, right=False) == sum(bins < x).
    x_rep = jnp.dot(x_ref[...], rep_ref[...], preferred_element_type=jnp.float32)
    onehot = ((x_rep > lo_ref[...]) & (x_rep <= hi_ref[...])).astype(jnp.float32)
    o_ref[...] = jnp.dot(onehot, tab_ref[...], preferred_element_type=jnp.float32)


def loudness_encoder_embed(x, energy_bins, emb_table):
    """x: [B, T] float32 -> [B, T, D] via bucketize(energy_bins) + embedding."""
    B, T = x.shape
    n_bins, D = emb_table.shape
    P = _pack_factor(D)

    # Per-bin [lo, hi] edges:  bucket(x) == b  <=>  lo[b] < x <= hi[b].
    # (n_bins == 1, i.e. empty energy_bins, degenerates to lo=-inf, hi=+inf.)
    bins = jnp.asarray(energy_bins, jnp.float32).reshape(-1)            # (NB-1,)
    lo = jnp.concatenate([jnp.full((1,), -jnp.inf, jnp.float32), bins])
    hi = jnp.concatenate([bins, jnp.full((1,), jnp.inf, jnp.float32)])
    lo_row = jnp.tile(lo, P)[None, :]                                   # (1, P*NB)
    hi_row = jnp.tile(hi, P)[None, :]                                   # (1, P*NB)
    eye_p = jnp.eye(P, dtype=jnp.float32)
    rep = jnp.kron(eye_p, jnp.ones((1, n_bins), jnp.float32))           # (P, P*NB)
    tab = jnp.kron(eye_p, emb_table.astype(jnp.float32))                # (P*NB, P*D)

    x_pk, n, n_pad = _pack_rows(x, P)
    n_rows = n_pad // P
    tile = _pick_tile(n_rows, P * D * 4)
    n_steps = _cdiv(n_rows, tile)        # partial tail block handled by Pallas

    out = pl.pallas_call(
        _bucketize_embed_kernel,
        out_shape=jax.ShapeDtypeStruct((n_rows, P * D), jnp.float32),
        grid_spec=pltpu.PrefetchScalarGridSpec(
            num_scalar_prefetch=0,
            grid=(n_steps,),
            in_specs=[
                pl.BlockSpec((tile, P), lambda i: (i, 0)),
                pl.BlockSpec((P, P * n_bins), lambda i: (0, 0)),
                pl.BlockSpec((1, P * n_bins), lambda i: (0, 0)),
                pl.BlockSpec((1, P * n_bins), lambda i: (0, 0)),
                pl.BlockSpec((P * n_bins, P * D), lambda i: (0, 0)),
            ],
            out_specs=pl.BlockSpec((tile, P * D), lambda i: (i, 0)),
        ),
        compiler_params=pltpu.CompilerParams(
            dimension_semantics=("parallel",)),
    )(x_pk, rep, lo_row, hi_row, tab)

    return _unpack_rows(out, n, n_pad, D, (B, T))


# ----------------------------------------------------------------------------
# Kernel 2: unsqueeze(-1) + Linear(1, D) (n_bins == 0 path), lane-dense packed
# ----------------------------------------------------------------------------
def _linear1_kernel(x_ref, wblk_ref, b_ref, o_ref):
    # x_ref   : (TMP, P)    f32
    # wblk_ref: (P, P*D)    f32  block-diagonal replication of w (row k = w on slot-k cols)
    # b_ref   : (1, P*D)    f32  bias tiled P times
    # o_ref   : (TMP, P*D)  f32  o[r, k*D + d] = x[P*r + k] * w[d] + b[d]
    o_ref[...] = (jnp.dot(x_ref[...], wblk_ref[...],
                          preferred_element_type=jnp.float32) + b_ref[...])


def loudness_encoder_linear(x, weight, bias):
    """x: [B, T] float32 -> [B, T, D] via Linear(1, D) applied to x.unsqueeze(-1)."""
    B, T = x.shape
    D = weight.shape[0]                  # torch Linear weight: [D, 1]
    P = _pack_factor(D)

    w = weight.reshape(-1).astype(jnp.float32)                          # (D,)
    wblk = jnp.kron(jnp.eye(P, dtype=jnp.float32), w[None, :])          # (P, P*D)
    b_row = jnp.tile(bias.reshape(-1).astype(jnp.float32), P)[None, :]  # (1, P*D)

    x_pk, n, n_pad = _pack_rows(x, P)
    n_rows = n_pad // P
    tile = _pick_tile(n_rows, P * D * 4)
    n_steps = _cdiv(n_rows, tile)

    out = pl.pallas_call(
        _linear1_kernel,
        out_shape=jax.ShapeDtypeStruct((n_rows, P * D), jnp.float32),
        grid_spec=pltpu.PrefetchScalarGridSpec(
            num_scalar_prefetch=0,
            grid=(n_steps,),
            in_specs=[
                pl.BlockSpec((tile, P), lambda i: (i, 0)),
                pl.BlockSpec((P, P * D), lambda i: (0, 0)),
                pl.BlockSpec((1, P * D), lambda i: (0, 0)),
            ],
            out_specs=pl.BlockSpec((tile, P * D), lambda i: (i, 0)),
        ),
        compiler_params=pltpu.CompilerParams(
            dimension_semantics=("parallel",)),
    )(x_pk, wblk, b_row)

    return _unpack_rows(out, n, n_pad, D, (B, T))


# ----------------------------------------------------------------------------
# Main
# ----------------------------------------------------------------------------
if __name__ == "__main__":
    # Small config consistent with the module.
    output_loudness_dim = 32
    n_bins_loudness = 32

    key = jax.random.PRNGKey(0)
    kx, kemb, kw, kb, kx2, kx3 = jax.random.split(key, 6)

    # Energy bins + embedding table (deterministic init, like the module).
    loudness_min, loudness_max = 1e-30, 1.5
    energy_bins = jnp.exp(
        jnp.linspace(np.log(loudness_min), np.log(loudness_max),
                     n_bins_loudness - 1)).astype(jnp.float32)
    emb_table = jax.random.normal(
        kemb, (n_bins_loudness, output_loudness_dim), jnp.float32)

    def ref_embed_fn(xv):
        idx = jnp.sum(energy_bins[None, :] < xv.reshape(-1)[:, None], axis=1)
        return emb_table[idx].reshape(*xv.shape, output_loudness_dim)

    # --- n_bins > 0 path, small shape (single grid step) ----------------------
    B, T = 2, 8
    x = jax.random.uniform(kx, (B, T), jnp.float32, minval=0.0, maxval=2.0)
    out_embed = jax.block_until_ready(
        loudness_encoder_embed(x, energy_bins, emb_table))
    assert out_embed.shape == (B, T, output_loudness_dim)
    np.testing.assert_allclose(np.asarray(out_embed), np.asarray(ref_embed_fn(x)),
                               rtol=1e-6, atol=1e-6)

    # --- n_bins > 0 path, larger shape (2-step grid + partial tail block) ------
    B2, T2 = 2, 400
    x2 = jax.random.uniform(kx2, (B2, T2), jnp.float32, minval=0.0, maxval=2.0)
    out_embed2 = jax.block_until_ready(
        loudness_encoder_embed(x2, energy_bins, emb_table))
    np.testing.assert_allclose(np.asarray(out_embed2), np.asarray(ref_embed_fn(x2)),
                               rtol=1e-6, atol=1e-6)

    # --- n_bins > 0 path, N not divisible by the pack factor (pad + slice path)
    B3, T3 = 1, 37
    x3 = jax.random.uniform(kx3, (B3, T3), jnp.float32, minval=0.0, maxval=2.0)
    out_embed3 = jax.block_until_ready(
        loudness_encoder_embed(x3, energy_bins, emb_table))
    np.testing.assert_allclose(np.asarray(out_embed3), np.asarray(ref_embed_fn(x3)),
                               rtol=1e-6, atol=1e-6)

    # --- n_bins == 0 path: Linear(1, D) on x.unsqueeze(-1) ---------------------
    bound = 1.0  # nn.Linear default init bound = 1/sqrt(in_features) = 1
    w_lin = jax.random.uniform(kw, (output_loudness_dim, 1), jnp.float32,
                               minval=-bound, maxval=bound)
    b_lin = jax.random.uniform(kb, (output_loudness_dim,), jnp.float32,
                               minval=-bound, maxval=bound)

    out_lin = jax.block_until_ready(loudness_encoder_linear(x, w_lin, b_lin))
    ref_lin = (x[..., None] * w_lin[:, 0][None, None, :]
               + b_lin[None, None, :])
    np.testing.assert_allclose(np.asarray(out_lin), np.asarray(ref_lin),
                               rtol=1e-5, atol=1e-5)

    out_lin3 = jax.block_until_ready(loudness_encoder_linear(x3, w_lin, b_lin))
    ref_lin3 = (x3[..., None] * w_lin[:, 0][None, None, :]
                + b_lin[None, None, :])
    np.testing.assert_allclose(np.asarray(out_lin3), np.asarray(ref_lin3),
                               rtol=1e-5, atol=1e-5)

    print("KERNEL_OK")
</pallas_src>

<mosaic_0001>
module attributes {stable_mosaic.version = 11 : i64} {
  func.func @_bucketize_embed_kernel(%arg0: i32, %arg1: memref<8x4xf32, #tpu.memory_space<vmem>>, %arg2: memref<4x128xf32, #tpu.memory_space<vmem>>, %arg3: memref<1x128xf32, #tpu.memory_space<vmem>>, %arg4: memref<1x128xf32, #tpu.memory_space<vmem>>, %arg5: memref<128x128xf32, #tpu.memory_space<vmem>>, %arg6: memref<8x128xf32, #tpu.memory_space<vmem>>) attributes {dimension_semantics = [#tpu.dimension_semantics<parallel>], iteration_bounds = array<i64: 1>, scalar_prefetch = 0 : i64, scratch_operands = 0 : i64, tpu.core_type = #tpu.core_type<tc>, window_params = [{transform_indices = @transform_0, window_bounds = array<i64: 8, 4>}, {pipeline_mode = #tpu.pipeline_mode<synchronous>, transform_indices = @transform_1, window_bounds = array<i64: 4, 128>}, {pipeline_mode = #tpu.pipeline_mode<synchronous>, transform_indices = @transform_2, window_bounds = array<i64: 1, 128>}, {pipeline_mode = #tpu.pipeline_mode<synchronous>, transform_indices = @transform_3, window_bounds = array<i64: 1, 128>}, {pipeline_mode = #tpu.pipeline_mode<synchronous>, transform_indices = @transform_4, window_bounds = array<i64: 128, 128>}, {transform_indices = @transform_5, window_bounds = array<i64: 8, 128>}]} {
    %c0 = arith.constant 0 : index
    %c0_0 = arith.constant 0 : index
    %0 = vector.load %arg1[%c0, %c0_0] : memref<8x4xf32, #tpu.memory_space<vmem>>, vector<8x4xf32>
    %c0_1 = arith.constant 0 : index
    %c0_2 = arith.constant 0 : index
    %1 = vector.load %arg2[%c0_1, %c0_2] : memref<4x128xf32, #tpu.memory_space<vmem>>, vector<4x128xf32>
    %cst = arith.constant dense<0.000000e+00> : vector<8x128xf32>
    %2 = tpu.matmul %0, %1, %cst {dimension_numbers = #tpu.dot_dimension_numbers<[1], [0], [0], [1], [0, 0, 1, 1], [], []>} : vector<8x4xf32>, vector<4x128xf32>, vector<8x128xf32> -> vector<8x128xf32>
    %c0_3 = arith.constant 0 : index
    %c0_4 = arith.constant 0 : index
    %3 = vector.load %arg3[%c0_3, %c0_4] : memref<1x128xf32, #tpu.memory_space<vmem>>, vector<1x128xf32>
    %4 = vector.broadcast %3 : vector<1x128xf32> to vector<8x128xf32>
    %5 = arith.cmpf ogt, %2, %4 : vector<8x128xf32>
    %c0_5 = arith.constant 0 : index
    %c0_6 = arith.constant 0 : index
    %6 = vector.load %arg4[%c0_5, %c0_6] : memref<1x128xf32, #tpu.memory_space<vmem>>, vector<1x128xf32>
    %7 = vector.broadcast %6 : vector<1x128xf32> to vector<8x128xf32>
    %8 = arith.cmpf ole, %2, %7 : vector<8x128xf32>
    %9 = arith.andi %5, %8 : vector<8x128xi1>
    %10 = arith.extui %9 : vector<8x128xi1> to vector<8x128xi32>
    %11 = arith.sitofp %10 : vector<8x128xi32> to vector<8x128xf32>
    %c0_7 = arith.constant 0 : index
    %c0_8 = arith.constant 0 : index
    %12 = vector.load %arg5[%c0_7, %c0_8] : memref<128x128xf32, #tpu.memory_space<vmem>>, vector<128x128xf32>
    %cst_9 = arith.constant dense<0.000000e+00> : vector<8x128xf32>
    %13 = tpu.matmul %11, %12, %cst_9 {dimension_numbers = #tpu.dot_dimension_numbers<[1], [0], [0], [1], [0, 0, 1, 1], [], []>} : vector<8x128xf32>, vector<128x128xf32>, vector<8x128xf32> -> vector<8x128xf32>
    %c0_10 = arith.constant 0 : index
    %c0_11 = arith.constant 0 : index
    %14 = vector.load %arg6[%c0_10, %c0_11] : memref<8x128xf32, #tpu.memory_space<vmem>>, vector<8x128xf32>
    tpu.vector_store %arg6[%c0_10, %c0_11], %13 {strides = array<i32>} : memref<8x128xf32, #tpu.memory_space<vmem>>, vector<8x128xf32>,
    return
  }
  func.func @transform_0(%arg0: i32) -> (i32, i32) {
    %c0_i32 = arith.constant 0 : i32
    %c0_i32_0 = arith.constant 0 : i32
    return %arg0, %c0_i32 : i32, i32
  }
  func.func @transform_1(%arg0: i32) -> (i32, i32) {
    %c0_i32 = arith.constant 0 : i32
    %c0_i32_0 = arith.constant 0 : i32
    %c0_i32_1 = arith.constant 0 : i32
    return %c0_i32, %c0_i32_0 : i32, i32
  }
  func.func @transform_2(%arg0: i32) -> (i32, i32) {
    %c0_i32 = arith.constant 0 : i32
    %c0_i32_0 = arith.constant 0 : i32
    %c0_i32_1 = arith.constant 0 : i32
    return %c0_i32, %c0_i32_0 : i32, i32
  }
  func.func @transform_3(%arg0: i32) -> (i32, i32) {
    %c0_i32 = arith.constant 0 : i32
    %c0_i32_0 = arith.constant 0 : i32
    %c0_i32_1 = arith.constant 0 : i32
    return %c0_i32, %c0_i32_0 : i32, i32
  }
  func.func @transform_4(%arg0: i32) -> (i32, i32) {
    %c0_i32 = arith.constant 0 : i32
    %c0_i32_0 = arith.constant 0 : i32
    %c0_i32_1 = arith.constant 0 : i32
    return %c0_i32, %c0_i32_0 : i32, i32
  }
  func.func @transform_5(%arg0: i32) -> (i32, i32) {
    %c0_i32 = arith.constant 0 : i32
    %c0_i32_0 = arith.constant 0 : i32
    return %arg0, %c0_i32 : i32, i32
  }
}

</mosaic_0001>

<llo_original>
// kernel: tpu_custom_call.1
$region0: #{tpu_custom_call.1}
  #allocation0 [shape = 'u32[]', space=smem, size = 0x4, offset = 0x4, fixed_abs, tag = 'smem constant byte address 0x4 - core index']
  #allocation1 [shape = 'u32[144,128]{1,0:T(1,128)}', space=vmem, size = 0x12000, scoped, tag = 'internal scratch']
  %s0 = inlined_call_operand.hbm [shape: f32[4,4], index: 0, kind: input, shape index: {}]
  %s1 = inlined_call_operand.hbm [shape: f32[4,128], index: 1, kind: input, shape index: {}]
  %s2 = inlined_call_operand.vmem [shape: f32[1,128], index: 2, kind: input, shape index: {}]
  %s3 = inlined_call_operand.vmem [shape: f32[1,128], index: 3, kind: input, shape index: {}]
  %s4 = inlined_call_operand.hbm [shape: f32[128,128], index: 4, kind: input, shape index: {}]
  %s5 = inlined_call_operand.hbm [shape: f32[4,128], index: 5, kind: output, shape index: {}]
  %s6 = sld [smem:[#allocation0]]
  $region42: #{tpu_custom_call.1} parent=0
    _
  %s8 = ssub.s32 1, %s6
  %s9 = scalar_select 0, %s8, %s6
  $region1: #{tpu_custom_call.1} parent=0
    #allocation2 [shape = 'u8[4096]{0}', space=vmem, size = 0x1000, scoped, tag = 'input window, operand 0, single buffered']
    #allocation3 [shape = 's32[1]{0}', space=sflag, size = 0x4, scoped, tag = 'scoped memory for tpu_custom_call.1']
    #allocation4 [shape = 's32[1]{0}', space=sflag, size = 0x4, scoped, tag = 'scoped memory for tpu_custom_call.1']
    #allocation5 [shape = 'u8[2048]{0}', space=vmem, size = 0x800, scoped, tag = 'input window, operand 1, single buffered']
    #allocation6 [shape = 's32[1]{0}', space=sflag, size = 0x4, scoped, tag = 'scoped memory for tpu_custom_call.1']
    #allocation7 [shape = 'u8[65536]{0}', space=vmem, size = 0x10000, scoped, tag = 'input window, operand 4, single buffered']
    #allocation8 [shape = 'u8[4096]{0}', space=vmem, size = 0x1000, scoped, tag = 'output window, operand 0, single buffered']
    %10 = vsyncpa [#allocation3], 0
    %11 = vsyncpa [#allocation6], 0
    %12 = vsyncpa [#allocation4], 0
    // Predicated region
    $region2: #{tpu_custom_call.1} parent=1 // pred_check
      _
    $region3: #{tpu_custom_call.1} parent=1 // pred_check_branch
      %14 = sbr.rel (0) target = $region5
    $region4: #{tpu_custom_call.1} parent=1 // pred_region
      %s16 = ssub.s32 128, 64
      %17 = vsyncadd [#allocation3], %s16
      %s18 = sshll.u32 [#allocation2], 4
      %s19 = int_to_ptr.vmem [resolvable:$true] %s18
      %24 = dma.hbm_to_vmem [thread:$0]  %s0, 64, %s19, [#allocation3], 64, 64, 4
    $region5: #{tpu_custom_call.1} parent=1 // pred_fallthru
      _
    // Predicated region
    $region6: #{tpu_custom_call.1} parent=1 // pred_check
      _
    $region7: #{tpu_custom_call.1} parent=1 // pred_check_branch
      %26 = sbr.rel (0) target = $region9
    $region8: #{tpu_custom_call.1} parent=1 // pred_region
      %s28 = ssub.s32 64, 64
      %29 = vsyncadd [#allocation6], %s28
      %s31 = sshll.u32 [#allocation5], 4
      %s32 = int_to_ptr.vmem [resolvable:$true] %s31
      %34 = dma.hbm_to_vmem [thread:$0]  %s1, 64, %s32, [#allocation6]
    $region9: #{tpu_custom_call.1} parent=1 // pred_fallthru
      _
    // Predicated region
    $region10: #{tpu_custom_call.1} parent=1 // pred_check
      _
    $region11: #{tpu_custom_call.1} parent=1 // pred_check_branch
      %36 = sbr.rel (0) target = $region13
    $region12: #{tpu_custom_call.1} parent=1 // pred_region
      _
    $region13: #{tpu_custom_call.1} parent=1 // pred_fallthru
      _
    // Predicated region
    $region14: #{tpu_custom_call.1} parent=1 // pred_check
      _
    $region15: #{tpu_custom_call.1} parent=1 // pred_check_branch
      %38 = sbr.rel (0) target = $region17
    $region16: #{tpu_custom_call.1} parent=1 // pred_region
      _
    $region17: #{tpu_custom_call.1} parent=1 // pred_fallthru
      _
    // Predicated region
    $region18: #{tpu_custom_call.1} parent=1 // pred_check
      _
    $region19: #{tpu_custom_call.1} parent=1 // pred_check_branch
      %40 = sbr.rel (0) target = $region21
    $region20: #{tpu_custom_call.1} parent=1 // pred_region
      %s42 = ssub.s32 2048, 2048
      %43 = vsyncadd [#allocation6], %s42
      %s44 = sshll.u32 [#allocation7], 4
      %s45 = int_to_ptr.vmem [resolvable:$true] %s44
      %50 = dma.hbm_to_vmem [thread:$0]  %s4, 2048, %s45, [#allocation6], 128, 128, 8
    $region21: #{tpu_custom_call.1} parent=1 // pred_fallthru
      _
    // Predicated region
    $region22: #{tpu_custom_call.1} parent=1 // pred_check
      _
    $region23: #{tpu_custom_call.1} parent=1 // pred_check_branch
      %52 = sbr.rel (0) target = $region25
    $region24: #{tpu_custom_call.1} parent=1 // pred_region
      %53 = dma.done [#allocation3], 128
    $region25: #{tpu_custom_call.1} parent=1 // pred_fallthru
      _
    // Predicated region
    $region26: #{tpu_custom_call.1} parent=1 // pred_check
      _
    $region27: #{tpu_custom_call.1} parent=1 // pred_check_branch
      %55 = sbr.rel (0) target = $region29
    $region28: #{tpu_custom_call.1} parent=1 // pred_region
      %56 = dma.done [#allocation6], 64
    $region29: #{tpu_custom_call.1} parent=1 // pred_fallthru
      _
    // Predicated region
    $region30: #{tpu_custom_call.1} parent=1 // pred_check
      _
    $region31: #{tpu_custom_call.1} parent=1 // pred_check_branch
      %58 = sbr.rel (0) target = $region33
    $region32: #{tpu_custom_call.1} parent=1 // pred_region
      %59 = dma.done [#allocation6], 2048
    $region33: #{tpu_custom_call.1} parent=1 // pred_fallthru
      _
    %v60 = vld [vmem:[#allocation2] sm:$0xff]
    %v61 = vld [vmem:[#allocation5] sm:$0xf]
    %vm62 = vcmask 31744
    %v64 = vsel %vm62, %v60, 0
    %vm66 = vcmask 1043456
    %v68 = vsel %vm66, %v61, 0
    %70 = vmatprep.subr.mxu0 0.0
    %71 = vmatpush1.msra.mxu0 %v68
    %72 = vmatprep.subr.mxu0 0.0
    %73 = vmatpush1.msra.mxu0 0.0
    %74 = vmatprep.subr.mxu0 0.0
    %75 = vmatpush1.msra.mxu0 0.0
    %76 = vmatprep.subr.mxu0 0.0
    %77 = vmatpush1.msra.mxu0 0.0
    %78 = vmatprep.subr.mxu0 0.0
    %79 = vmatpush1.msra.mxu0 0.0
    %80 = vmatprep.subr.mxu0 0.0
    %81 = vmatpush1.msra.mxu0 0.0
    %82 = vmatprep.subr.mxu0 0.0
    %83 = vmatpush1.msra.mxu0 0.0
    %84 = vmatprep.subr.mxu0 0.0
    %85 = vmatpush1.msra.mxu0 0.0
    %86 = vmatprep.subr.mxu0 0.0
    %87 = vmatpush1.msra.mxu0 0.0
    %88 = vmatprep.subr.mxu0 0.0
    %89 = vmatpush1.msra.mxu0 0.0
    %90 = vmatprep.subr.mxu0 0.0
    %91 = vmatpush1.msra.mxu0 0.0
    %92 = vmatprep.subr.mxu0 0.0
    %93 = vmatpush1.msra.mxu0 0.0
    %94 = vmatprep.subr.mxu0 0.0
    %95 = vmatpush1.msra.mxu0 0.0
    %96 = vmatprep.subr.mxu0 0.0
    %97 = vmatpush1.msra.mxu0 0.0
    %98 = vmatprep.subr.mxu0 0.0
    %99 = vmatpush1.msra.mxu0 0.0
    %100 = vmatprep.subr.mxu0 0.0
    %101 = vmatpush1.msra.mxu0 0.0
    %102 = vmatprep.subr.mxu0 0.0
    %103 = vmatpush1.msra.mxu0 0.0
    %104 = vmatprep.subr.mxu0 0.0
    %105 = vmatpush1.msra.mxu0 0.0
    %106 = vmatprep.subr.mxu0 0.0
    %107 = vmatpush1.msra.mxu0 0.0
    %108 = vmatprep.subr.mxu0 0.0
    %109 = vmatpush1.msra.mxu0 0.0
    %110 = vmatprep.subr.mxu0 0.0
    %111 = vmatpush1.msra.mxu0 0.0
    %112 = vmatprep.subr.mxu0 0.0
    %113 = vmatpush1.msra.mxu0 0.0
    %114 = vmatprep.subr.mxu0 0.0
    %115 = vmatpush1.msra.mxu0 0.0
    %116 = vmatprep.subr.mxu0 0.0
    %117 = vmatpush1.msra.mxu0 0.0
    %118 = vmatprep.subr.mxu0 0.0
    %119 = vmatpush1.msra.mxu0 0.0
    %120 = vmatprep.subr.mxu0 0.0
    %121 = vmatpush1.msra.mxu0 0.0
    %122 = vmatprep.subr.mxu0 0.0
    %123 = vmatpush1.msra.mxu0 0.0
    %124 = vmatprep.subr.mxu0 0.0
    %125 = vmatpush1.msra.mxu0 0.0
    %126 = vmatprep.subr.mxu0 0.0
    %127 = vmatpush1.msra.mxu0 0.0
    %128 = vmatprep.subr.mxu0 0.0
    %129 = vmatpush1.msra.mxu0 0.0
    %130 = vmatprep.subr.mxu0 0.0
    %131 = vmatpush1.msra.mxu0 0.0
    %132 = vmatprep.subr.mxu0 0.0
    %133 = vmatpush1.msra.mxu0 0.0
    %134 = vmatprep.mubr.f32.mxu0 0.0
    %135 = vmatmul.mubr.f32.gmra.mrb[0].mxu0 %v64
    %v136 = vpop.f32.mrb[0].mxu0
    %v137 = vadd.f32 0.0, %v136
    %v138 = vpop.f32.mrb[0].mxu0
    %139 = vdwg.mxu0
    %v140 = vld [vmem:[%s2] sm:$0x1]
    %v142 = vlaneseq
    %v143 = vshrl.u32 %v142, 7
    %v144 = vsub.s32 0, %v143
    %v145 = vrot.slane %v140, %v144
    %vm147 = vcmp.gt.f32.partialorder %v137, %v145
    %v148 = vld [vmem:[%s3] sm:$0x1]
    %v150 = vlaneseq
    %v151 = vshrl.u32 %v150, 7
    %v152 = vsub.s32 0, %v151
    %v153 = vrot.slane %v148, %v152
    %vm155 = vcmp.le.f32.partialorder %v137, %v153
    %vm156 = vmand %vm147, %vm155
    %v157 = vsel %vm156, 1, 0
    %v158 = vcvt.s32.f32 %v157
    %v159 = vld [vmem:[#allocation7] sm:$0xff]
    %v160 = vld [vmem:[#allocation7 + $0x8] sm:$0xff]
    %v161 = vld [vmem:[#allocation7 + $0x10] sm:$0xff]
    %v162 = vld [vmem:[#allocation7 + $0x18] sm:$0xff]
    %v163 = vld [vmem:[#allocation7 + $0x20] sm:$0xff]
    %v164 = vld [vmem:[#allocation7 + $0x28] sm:$0xff]
    %v165 = vld [vmem:[#allocation7 + $0x30] sm:$0xff]
    %v166 = vld [vmem:[#allocation7 + $0x38] sm:$0xff]
    %v167 = vld [vmem:[#allocation7 + $0x40] sm:$0xff]
    %v168 = vld [vmem:[#allocation7 + $0x48] sm:$0xff]
    %v169 = vld [vmem:[#allocation7 + $0x50] sm:$0xff]
    %v170 = vld [vmem:[#allocation7 + $0x58] sm:$0xff]
    %v171 = vld [vmem:[#allocation7 + $0x60] sm:$0xff]
    %v172 = vld [vmem:[#allocation7 + $0x68] sm:$0xff]
    %v173 = vld [vmem:[#allocation7 + $0x70] sm:$0xff]
    %v174 = vld [vmem:[#allocation7 + $0x78] sm:$0xff]
    %175 = vmatprep.subr.mxu0 0.0
    %176 = vmatpush1.msra.mxu0 %v159
    %177 = vmatprep.subr.mxu0 0.0
    %178 = vmatpush1.msra.mxu0 %v160
    %179 = vmatprep.subr.mxu0 0.0
    %180 = vmatpush1.msra.mxu0 %v161
    %181 = vmatprep.subr.mxu0 0.0
    %182 = vmatpush1.msra.mxu0 %v162
    %183 = vmatprep.subr.mxu0 0.0
    %184 = vmatpush1.msra.mxu0 %v163
    %185 = vmatprep.subr.mxu0 0.0
    %186 = vmatpush1.msra.mxu0 %v164
    %187 = vmatprep.subr.mxu0 0.0
    %188 = vmatpush1.msra.mxu0 %v165
    %189 = vmatprep.subr.mxu0 0.0
    %190 = vmatpush1.msra.mxu0 %v166
    %191 = vmatprep.subr.mxu0 0.0
    %192 = vmatpush1.msra.mxu0 %v167
    %193 = vmatprep.subr.mxu0 0.0
    %194 = vmatpush1.msra.mxu0 %v168
    %195 = vmatprep.subr.mxu0 0.0
    %196 = vmatpush1.msra.mxu0 %v169
    %197 = vmatprep.subr.mxu0 0.0
    %198 = vmatpush1.msra.mxu0 %v170
    %199 = vmatprep.subr.mxu0 0.0
    %200 = vmatpush1.msra.mxu0 %v171
    %201 = vmatprep.subr.mxu0 0.0
    %202 = vmatpush1.msra.mxu0 %v172
    %203 = vmatprep.subr.mxu0 0.0
    %204 = vmatpush1.msra.mxu0 %v173
    %205 = vmatprep.subr.mxu0 0.0
    %206 = vmatpush1.msra.mxu0 %v174
    %207 = vmatprep.subr.mxu0 0.0
    %208 = vmatpush1.msra.mxu0 0.0
    %209 = vmatprep.subr.mxu0 0.0
    %210 = vmatpush1.msra.mxu0 0.0
    %211 = vmatprep.subr.mxu0 0.0
    %212 = vmatpush1.msra.mxu0 0.0
    %213 = vmatprep.subr.mxu0 0.0
    %214 = vmatpush1.msra.mxu0 0.0
    %215 = vmatprep.subr.mxu0 0.0
    %216 = vmatpush1.msra.mxu0 0.0
    %217 = vmatprep.subr.mxu0 0.0
    %218 = vmatpush1.msra.mxu0 0.0
    %219 = vmatprep.subr.mxu0 0.0
    %220 = vmatpush1.msra.mxu0 0.0
    %221 = vmatprep.subr.mxu0 0.0
    %222 = vmatpush1.msra.mxu0 0.0
    %223 = vmatprep.subr.mxu0 0.0
    %224 = vmatpush1.msra.mxu0 0.0
    %225 = vmatprep.subr.mxu0 0.0
    %226 = vmatpush1.msra.mxu0 0.0
    %227 = vmatprep.subr.mxu0 0.0
    %228 = vmatpush1.msra.mxu0 0.0
    %229 = vmatprep.subr.mxu0 0.0
    %230 = vmatpush1.msra.mxu0 0.0
    %231 = vmatprep.subr.mxu0 0.0
    %232 = vmatpush1.msra.mxu0 0.0
    %233 = vmatprep.subr.mxu0 0.0
    %234 = vmatpush1.msra.mxu0 0.0
    %235 = vmatprep.subr.mxu0 0.0
    %236 = vmatpush1.msra.mxu0 0.0
    %237 = vmatprep.subr.mxu0 0.0
    %238 = vmatpush1.msra.mxu0 0.0
    %239 = vmatprep.mubr.f32.mxu0 0.0
    %240 = vmatmul.mubr.f32.gmra.mrb[0].mxu0 %v158
    %v241 = vpop.f32.mrb[0].mxu0
    %v242 = vadd.f32 0.0, %v241
    %v243 = vpop.f32.mrb[0].mxu0
    %244 = vdwg.mxu0
    %245 = vst [vmem:[#allocation8] sm:$0xff] %v242
    // Predicated region
    $region34: #{tpu_custom_call.1} parent=1 // pred_check
      _
    $region35: #{tpu_custom_call.1} parent=1 // pred_check_branch
      %247 = sbr.rel (0) target = $region37
    $region36: #{tpu_custom_call.1} parent=1 // pred_region
      %s249 = ssub.s32 128, 64
      %250 = vsyncadd [#allocation4], %s249
      %s251 = sshll.u32 [#allocation8], 4
      %s252 = int_to_ptr.vmem [resolvable:$true] %s251
      %257 = dma.vmem_to_hbm [thread:$0]  %s252, 64, %s5, [#allocation4], 64, 64, 4
    $region37: #{tpu_custom_call.1} parent=1 // pred_fallthru
      _
    // Predicated region
    $region38: #{tpu_custom_call.1} parent=1 // pred_check
      _
    $region39: #{tpu_custom_call.1} parent=1 // pred_check_branch
      %259 = sbr.rel (0) target = $region41
    $region40: #{tpu_custom_call.1} parent=1 // pred_region
      %260 = dma.done [#allocation4], 128
    $region41: #{tpu_custom_call.1} parent=1 // pred_fallthru
      _
    %261 = vsyncpa [#allocation3], 1
    %262 = vsyncpa [#allocation6], 1
    %263 = vsyncpa [#allocation4], 1

</llo_original>
